<compile_context>
chip_gen: v6e
topology: v6e:2x2x1
jax: 0.10.0
libtpu: 0.0.40
codegen_flags: <defaults>
</compile_context>

<pallas_src>
import functools
import math

import jax
import jax.numpy as jnp
from jax import lax
from jax.experimental import pallas as pl
from jax.experimental.pallas import tpu as pltpu

_LANES = 128
_SUBLANES = 8
_TILE_ROWS = 2048          # 2048 x 128 f32 = 1 MiB per input buffer
_EPS = 1e-7
_LOG_EPS = math.log(_EPS)
_NEUTRAL_LOGIT = -100.0    # with t = 0 this contributes exactly 0 loss


def _round_up(x, m):
    return ((x + m - 1) // m) * m


def _focal_loss_kernel(x_ref, t_ref, out_ref, acc_ref, *,
                       alpha, gamma, tile_r, grid_r, total_blocks,
                       valid_rows_last, mask_last, redundant):
    c = pl.program_id(0)          # core-split axis ("parallel")
    i = pl.program_id(1)          # reduction axis ("arbitrary")
    blk = c * grid_r + i          # logical block index over the whole array

    @pl.when(i == 0)
    def _():
        acc_ref[...] = jnp.zeros_like(acc_ref)

    x = x_ref[...].astype(jnp.float32)
    t = t_ref[...].astype(jnp.float32)

    # Stable softplus: sp = log(1 + e^x).  Then
    #   log(sigmoid(x))     = x - sp
    #   log(1 - sigmoid(x)) = -sp
    # Clamping the logs at log(1e-7) reproduces the reference's
    # probs.clamp(1e-7, 1 - 1e-7); p itself needs no extra clip (it only feeds the
    # power terms, where the deviation is < ~2e-7 relative).
    sp = jnp.maximum(x, 0.0) + jnp.log(1.0 + jnp.exp(-jnp.abs(x)))
    log_p = jnp.maximum(x - sp, _LOG_EPS)
    log_1mp = jnp.maximum(-sp, _LOG_EPS)
    p = jnp.exp(x - sp)                    # sigmoid(x)
    one_m_p = 1.0 - p

    g = float(gamma)
    if g == 2.0:                           # fast path: explicit squaring, no pow
        p_pow = p * p
        omp_pow = one_m_p * one_m_p
    elif g.is_integer() and g >= 0.0:
        p_pow = lax.integer_pow(p, int(g))
        omp_pow = lax.integer_pow(one_m_p, int(g))
    else:
        p_pow = p ** g
        omp_pow = one_m_p ** g

    # Signs/constants folded at trace time -> one scalar multiply per term.
    loss = (-alpha) * (omp_pow * t * log_p) \
         + (alpha - 1.0) * (p_pow * (1.0 - t) * log_1mp)

    def _accumulate(contrib):
        # (tile_r,128) -> (tile_r/8, 8, 128); summing the leading dim is pure vreg
        # adds into the resident (8,128) f32 accumulator (no XLU work per step).
        acc_ref[...] += contrib.reshape(
            tile_r // _SUBLANES, _SUBLANES, _LANES).sum(axis=0)

    if mask_last:
        # Hot path: every full interior block accumulates with zero masking work.
        @pl.when(blk < total_blocks - 1)
        def _():
            _accumulate(loss)

        # Cold path (fires on exactly one grid step): the last block is a partial
        # edge block, so rows beyond the (padded) array hold garbage in VMEM —
        # mask them with a row-only iota (no int32 global-index overflow risk).
        @pl.when(blk == total_blocks - 1)
        def _():
            row = lax.broadcasted_iota(jnp.int32, loss.shape, 0)
            _accumulate(jnp.where(row < valid_rows_last, loss, 0.0))
        # blk > total_blocks - 1 (a single redundant clamped step, if any)
        # contributes nothing.
    elif redundant:
        @pl.when(blk < total_blocks)
        def _():
            _accumulate(loss)
    else:
        _accumulate(loss)

    @pl.when(i == grid_r - 1)
    def _():
        out_ref[0, 0] = jnp.sum(acc_ref[...])   # one cross-lane reduce per core


def binary_focal_loss(logits, targets, *, alpha=0.25, gamma=2.0,
                      reduction="mean", tile_rows=None):
    """Matches BinaryFocalLoss.forward: returns a scalar f32 loss."""
    assert reduction in ("mean", "sum")
    n = int(logits.size)
    assert int(targets.size) == n and n > 0

    tile_rows = _TILE_ROWS if tile_rows is None else int(tile_rows)
    assert tile_rows % _SUBLANES == 0 and tile_rows > 0

    x = jnp.reshape(logits, (-1,))
    t = jnp.reshape(targets, (-1,))

    # Minimal alignment pad (one 8x128 granule at most) with loss-neutral values:
    # x = -100, t = 0 contributes exactly 0 (log(1-p) clamps to 0, t * ... = 0), so
    # no in-kernel masking is needed for this padding.  Skipped entirely (no extra
    # HBM pass) when the flat size is already 1024-aligned.
    granule = _SUBLANES * _LANES
    n_pad = _round_up(n, granule)
    if n_pad != n:
        x = jnp.pad(x, (0, n_pad - n), constant_values=_NEUTRAL_LOGIT)
        t = jnp.pad(t, (0, n_pad - n), constant_values=0)
    rows = n_pad // _LANES
    x = jnp.reshape(x, (rows, _LANES))
    t = jnp.reshape(t, (rows, _LANES))

    tile_r = min(tile_rows, rows)               # rows is a multiple of 8, so is tile_r
    total_blocks = -(-rows // tile_r)
    # 2-way split of the reduction (real 2x on v7x megacore, sequential elsewhere);
    # skip it when an odd, small block count would waste a full tile of DMA.
    if total_blocks >= 2 and (total_blocks % 2 == 0 or total_blocks >= 8):
        nc = 2
    else:
        nc = 1
    grid_r = -(-total_blocks // nc)
    mask_last = (rows % tile_r) != 0            # Pallas partial edge block at the end
    redundant = nc * grid_r > total_blocks      # at most one clamped/skipped step
    valid_rows_last = rows - (total_blocks - 1) * tile_r
    last_block = total_blocks - 1

    def data_map(c, i):
        # Clamp so a redundant trailing step never issues an out-of-bounds DMA.
        return (jnp.minimum(c * grid_r + i, last_block), 0)

    kernel = functools.partial(
        _focal_loss_kernel,
        alpha=float(alpha), gamma=float(gamma),
        tile_r=tile_r, grid_r=grid_r, total_blocks=total_blocks,
        valid_rows_last=valid_rows_last, mask_last=mask_last, redundant=redundant,
    )

    partials = pl.pallas_call(
        kernel,
        out_shape=jax.ShapeDtypeStruct((nc, 1), jnp.float32),
        grid_spec=pltpu.PrefetchScalarGridSpec(
            num_scalar_prefetch=0,
            grid=(nc, grid_r),
            in_specs=[
                pl.BlockSpec((tile_r, _LANES), data_map),
                pl.BlockSpec((tile_r, _LANES), data_map),
            ],
            out_specs=pl.BlockSpec((1, 1), lambda c, i: (c, 0),
                                   memory_space=pltpu.SMEM),
            scratch_shapes=[pltpu.VMEM((_SUBLANES, _LANES), jnp.float32)],
        ),
        compiler_params=pltpu.CompilerParams(
            dimension_semantics=("parallel", "arbitrary"),
        ),
    )(x, t)

    total = jnp.sum(partials)
    if reduction == "mean":
        total = total * jnp.float32(1.0 / n)
    return total


def _reference_focal_loss(logits, targets, alpha=0.25, gamma=2.0, reduction="mean"):
    probs = jnp.clip(jax.nn.sigmoid(logits.astype(jnp.float32)), 1e-7, 1 - 1e-7)
    t = targets.astype(jnp.float32)
    lp = -alpha * (1 - probs) ** gamma * t * jnp.log(probs)
    ln = -(1 - alpha) * probs ** gamma * (1 - t) * jnp.log(1 - probs)
    loss = lp + ln
    return jnp.mean(loss) if reduction == "mean" else jnp.sum(loss)


if __name__ == "__main__":
    key = jax.random.PRNGKey(0)
    k1, k2, k3, k4, k5, k6 = jax.random.split(key, 6)

    # 1) Typical binary-classification MLP head: (batch, 1) logits + {0,1} targets.
    batch = 256
    logits = jax.random.normal(k1, (batch, 1), dtype=jnp.float32) * 3.0
    targets = (jax.random.uniform(k2, (batch, 1)) > 0.5).astype(jnp.float32)
    loss = jax.block_until_ready(binary_focal_loss(logits, targets))
    ref = _reference_focal_loss(logits, targets)
    assert jnp.allclose(loss, ref, rtol=1e-5, atol=1e-6), (loss, ref)

    # 2) Ragged, non-1024-aligned shape: exercises the minimal loss-neutral pad.
    logits2 = jax.random.normal(k3, (3, 333), dtype=jnp.float32) * 2.0
    targets2 = (jax.random.uniform(k4, (3, 333)) > 0.5).astype(jnp.float32)
    loss2 = jax.block_until_ready(
        binary_focal_loss(logits2, targets2, reduction="sum"))
    ref2 = _reference_focal_loss(logits2, targets2, reduction="sum")
    assert jnp.allclose(loss2, ref2, rtol=1e-5, atol=1e-5), (loss2, ref2)

    # 3) Multi-block path with a small test tile: 2-way split, partial (masked)
    #    last block and one redundant (skipped) grid step.
    n3 = 70_356
    logits3 = jax.random.normal(k5, (n3,), dtype=jnp.float32) * 2.5
    targets3 = (jax.random.uniform(k6, (n3,)) > 0.5).astype(jnp.float32)
    loss3 = jax.block_until_ready(binary_focal_loss(logits3, targets3, tile_rows=64))
    ref3 = _reference_focal_loss(logits3, targets3)
    assert jnp.allclose(loss3, ref3, rtol=1e-4, atol=1e-6), (loss3, ref3)

    # 4) bf16 logits pass straight through the BlockSpec (upcast happens in-kernel).
    logits4 = logits.astype(jnp.bfloat16)
    loss4 = jax.block_until_ready(binary_focal_loss(logits4, targets))
    ref4 = _reference_focal_loss(logits4, targets)
    assert jnp.allclose(loss4, ref4, rtol=1e-5, atol=1e-6), (loss4, ref4)

    print("KERNEL_OK")
</pallas_src>

<mosaic_0001>
module attributes {stable_mosaic.version = 11 : i64} {
  func.func @_focal_loss_kernel(%arg0: i32, %arg1: i32, %arg2: memref<8x128xf32, #tpu.memory_space<vmem>>, %arg3: memref<8x128xf32, #tpu.memory_space<vmem>>, %arg4: memref<1x1xf32, #tpu.memory_space<smem>>, %arg5: memref<8x128xf32, #tpu.memory_space<vmem>>) attributes {dimension_semantics = [#tpu.dimension_semantics<parallel>, #tpu.dimension_semantics<arbitrary>], iteration_bounds = array<i64: 1, 1>, scalar_prefetch = 0 : i64, scratch_operands = 1 : i64, tpu.core_type = #tpu.core_type<tc>, window_params = [{transform_indices = @transform_0, window_bounds = array<i64: 8, 128>}, {transform_indices = @transform_1, window_bounds = array<i64: 8, 128>}, {transform_indices = @transform_2, window_bounds = array<i64: 1, 1>}]} {
    %c0_i32 = arith.constant 0 : i32
    %0 = arith.cmpi eq, %arg1, %c0_i32 : i32
    %1 = arith.extui %0 : i1 to i32
    %c0_i32_0 = arith.constant 0 : i32
    %2 = arith.cmpi ne, %1, %c0_i32_0 : i32
    scf.if %2 {
      %cst_20 = arith.constant 0.000000e+00 : f32
      %47 = vector.broadcast %cst_20 : f32 to vector<8x128xf32>
      %c0_21 = arith.constant 0 : index
      %c0_22 = arith.constant 0 : index
      %48 = vector.load %arg5[%c0_21, %c0_22] : memref<8x128xf32, #tpu.memory_space<vmem>>, vector<8x128xf32>
      tpu.vector_store %arg5[%c0_21, %c0_22], %47 {strides = array<i32>} : memref<8x128xf32, #tpu.memory_space<vmem>>, vector<8x128xf32>,
    } else {
    }
    %c0 = arith.constant 0 : index
    %c0_1 = arith.constant 0 : index
    %3 = vector.load %arg2[%c0, %c0_1] : memref<8x128xf32, #tpu.memory_space<vmem>>, vector<8x128xf32>
    %c0_2 = arith.constant 0 : index
    %c0_3 = arith.constant 0 : index
    %4 = vector.load %arg3[%c0_2, %c0_3] : memref<8x128xf32, #tpu.memory_space<vmem>>, vector<8x128xf32>
    %cst = arith.constant 0.000000e+00 : f32
    %5 = vector.broadcast %cst : f32 to vector<8x128xf32>
    %6 = arith.maximumf %3, %5 : vector<8x128xf32>
    %7 = math.absf %3 : vector<8x128xf32>
    %cst_4 = arith.constant 0.000000e+00 : f32
    %8 = vector.broadcast %cst_4 : f32 to vector<8x128xf32>
    %9 = arith.subf %8, %7 : vector<8x128xf32>
    %10 = math.exp %9 : vector<8x128xf32>
    %cst_5 = arith.constant 1.000000e+00 : f32
    %11 = vector.broadcast %cst_5 : f32 to vector<8x128xf32>
    %12 = arith.addf %11, %10 : vector<8x128xf32>
    %13 = math.log %12 : vector<8x128xf32>
    %14 = arith.addf %6, %13 : vector<8x128xf32>
    %15 = arith.subf %3, %14 : vector<8x128xf32>
    %cst_6 = arith.constant -16.1180954 : f32
    %16 = vector.broadcast %cst_6 : f32 to vector<8x128xf32>
    %17 = arith.maximumf %15, %16 : vector<8x128xf32>
    %cst_7 = arith.constant 0.000000e+00 : f32
    %18 = vector.broadcast %cst_7 : f32 to vector<8x128xf32>
    %19 = arith.subf %18, %14 : vector<8x128xf32>
    %cst_8 = arith.constant -16.1180954 : f32
    %20 = vector.broadcast %cst_8 : f32 to vector<8x128xf32>
    %21 = arith.maximumf %19, %20 : vector<8x128xf32>
    %22 = arith.subf %3, %14 : vector<8x128xf32>
    %23 = math.exp %22 : vector<8x128xf32>
    %cst_9 = arith.constant 1.000000e+00 : f32
    %24 = vector.broadcast %cst_9 : f32 to vector<8x128xf32>
    %25 = arith.subf %24, %23 : vector<8x128xf32>
    %26 = arith.mulf %23, %23 : vector<8x128xf32>
    %27 = arith.mulf %25, %25 : vector<8x128xf32>
    %28 = arith.mulf %27, %4 : vector<8x128xf32>
    %29 = arith.mulf %28, %17 : vector<8x128xf32>
    %cst_10 = arith.constant -2.500000e-01 : f32
    %30 = vector.broadcast %cst_10 : f32 to vector<8x128xf32>
    %31 = arith.mulf %30, %29 : vector<8x128xf32>
    %cst_11 = arith.constant 1.000000e+00 : f32
    %32 = vector.broadcast %cst_11 : f32 to vector<8x128xf32>
    %33 = arith.subf %32, %4 : vector<8x128xf32>
    %34 = arith.mulf %26, %33 : vector<8x128xf32>
    %35 = arith.mulf %34, %21 : vector<8x128xf32>
    %cst_12 = arith.constant -7.500000e-01 : f32
    %36 = vector.broadcast %cst_12 : f32 to vector<8x128xf32>
    %37 = arith.mulf %36, %35 : vector<8x128xf32>
    %38 = arith.addf %31, %37 : vector<8x128xf32>
    %c0_13 = arith.constant 0 : index
    %c0_14 = arith.constant 0 : index
    %39 = vector.load %arg5[%c0_13, %c0_14] : memref<8x128xf32, #tpu.memory_space<vmem>>, vector<8x128xf32>
    %40 = vector.shape_cast %38 : vector<8x128xf32> to vector<1x8x128xf32>
    %cst_15 = arith.constant dense<0.000000e+00> : vector<8x128xf32>
    %41 = vector.multi_reduction <add>, %40, %cst_15 [0] : vector<1x8x128xf32> to vector<8x128xf32>
    %42 = arith.addf %39, %41 : vector<8x128xf32>
    %c0_16 = arith.constant 0 : index
    %c0_17 = arith.constant 0 : index
    %43 = vector.load %arg5[%c0_16, %c0_17] : memref<8x128xf32, #tpu.memory_space<vmem>>, vector<8x128xf32>
    tpu.vector_store %arg5[%c0_16, %c0_17], %42 {strides = array<i32>} : memref<8x128xf32, #tpu.memory_space<vmem>>, vector<8x128xf32>,
    %c0_i32_18 = arith.constant 0 : i32
    %44 = arith.cmpi eq, %arg1, %c0_i32_18 : i32
    %45 = arith.extui %44 : i1 to i32
    %c0_i32_19 = arith.constant 0 : i32
    %46 = arith.cmpi ne, %45, %c0_i32_19 : i32
    scf.if %46 {
      %c0_20 = arith.constant 0 : index
      %c0_21 = arith.constant 0 : index
      %47 = vector.load %arg5[%c0_20, %c0_21] : memref<8x128xf32, #tpu.memory_space<vmem>>, vector<8x128xf32>
      %48 = vector.shape_cast %47 : vector<8x128xf32> to vector<1x8x128xf32>
      %cst_22 = arith.constant dense<0.000000e+00> : vector<1xf32>
      %49 = vector.multi_reduction <add>, %48, %cst_22 [1, 2] : vector<1x8x128xf32> to vector<1xf32>
      %50 = vector.shape_cast %49 : vector<1xf32> to vector<1x1x1xf32>
      %51 = vector.extract %50[0, 0, 0] : f32 from vector<1x1x1xf32>
      %c0_23 = arith.constant 0 : index
      %c0_24 = arith.constant 0 : index
      %52 = memref.load %arg4[%c0_23, %c0_24] : memref<1x1xf32, #tpu.memory_space<smem>>
      memref.store %51, %arg4[%c0_23, %c0_24] : memref<1x1xf32, #tpu.memory_space<smem>>
    } else {
    }
    return
  }
  func.func @transform_0(%arg0: i32, %arg1: i32) -> (i32, i32) {
    %c1_i32 = arith.constant 1 : i32
    %0 = arith.muli %arg0, %c1_i32 : i32
    %1 = arith.addi %0, %arg1 : i32
    %c0_i32 = arith.constant 0 : i32
    %2 = arith.minsi %1, %c0_i32 : i32
    %c0_i32_0 = arith.constant 0 : i32
    %c0_i32_1 = arith.constant 0 : i32
    return %2, %c0_i32_0 : i32, i32
  }
  func.func @transform_1(%arg0: i32, %arg1: i32) -> (i32, i32) {
    %c1_i32 = arith.constant 1 : i32
    %0 = arith.muli %arg0, %c1_i32 : i32
    %1 = arith.addi %0, %arg1 : i32
    %c0_i32 = arith.constant 0 : i32
    %2 = arith.minsi %1, %c0_i32 : i32
    %c0_i32_0 = arith.constant 0 : i32
    %c0_i32_1 = arith.constant 0 : i32
    return %2, %c0_i32_0 : i32, i32
  }
  func.func @transform_2(%arg0: i32, %arg1: i32) -> (i32, i32) {
    %c0_i32 = arith.constant 0 : i32
    %c0_i32_0 = arith.constant 0 : i32
    return %arg0, %c0_i32 : i32, i32
  }
}

</mosaic_0001>

<llo_original>
// kernel: tpu_custom_call.1
$region0: #{tpu_custom_call.1}
  #allocation0 [shape = 'u32[]', space=smem, size = 0x4, offset = 0x4, fixed_abs, tag = 'smem constant byte address 0x4 - core index']
  #allocation1 [shape = 'u32[144,128]{1,0:T(1,128)}', space=vmem, size = 0x12000, scoped, tag = 'internal scratch']
  #allocation2 [shape = 'f32[8,128]{1,0:T(8,128)}', space=vmem, size = 0x1000, scoped, tag = 'scratch operand']
  %s0 = inlined_call_operand.hbm [shape: f32[8,128], index: 0, kind: input, shape index: {}]
  %s1 = inlined_call_operand.hbm [shape: f32[8,128], index: 1, kind: input, shape index: {}]
  %s2 = inlined_call_operand.hbm [shape: f32[1,1], index: 2, kind: output, shape index: {}]
  %s3 = sld [smem:[#allocation0]]
  $region34: #{tpu_custom_call.1} parent=0
    _
  %s5 = ssub.s32 1, %s3
  %s6 = scalar_select 0, %s5, %s3
  $region1: #{tpu_custom_call.1} parent=0
    #allocation3 [shape = 'u8[4096]{0}', space=vmem, size = 0x1000, scoped, tag = 'input window, operand 0, single buffered']
    #allocation4 [shape = 's32[1]{0}', space=sflag, size = 0x4, scoped, tag = 'scoped memory for tpu_custom_call.1']
    #allocation5 [shape = 's32[1]{0}', space=sflag, size = 0x4, scoped, tag = 'scoped memory for tpu_custom_call.1']
    #allocation6 [shape = 'u8[4096]{0}', space=vmem, size = 0x1000, scoped, tag = 'input window, operand 1, single buffered']
    #allocation7 [shape = 's32[1]{0}', space=sflag, size = 0x4, scoped, tag = 'scoped memory for tpu_custom_call.1']
    #allocation8 [shape = 'u8[512]{0}', space=smem, size = 0x200, scoped, tag = 'output window, operand 0, single buffered']
    %7 = vsyncpa [#allocation4], 0
    %8 = vsyncpa [#allocation7], 0
    %9 = vsyncpa [#allocation5], 0
    // Predicated region
    $region2: #{tpu_custom_call.1} parent=1 // pred_check
      _
    $region3: #{tpu_custom_call.1} parent=1 // pred_check_branch
      %11 = sbr.rel (0) target = $region5
    $region4: #{tpu_custom_call.1} parent=1 // pred_region
      %s12 = sadd.s32 0, 0
      %p13 = scmp.lt.s32.totalorder %s12, 0
      %s14 = scalar_select %p13, %s12, 0
      %s16 = ssub.s32 128, 128
      %17 = vsyncadd [#allocation4], %s16
      %s18 = smul.addr %s14, 128
      %s19 = scalar_lea.hbm %s0, %s18
      %s21 = sshll.u32 [#allocation3], 4
      %s22 = int_to_ptr.vmem [resolvable:$true] %s21
      %24 = dma.hbm_to_vmem [thread:$0]  %s19, 128, %s22, [#allocation4]
    $region5: #{tpu_custom_call.1} parent=1 // pred_fallthru
      _
    // Predicated region
    $region6: #{tpu_custom_call.1} parent=1 // pred_check
      _
    $region7: #{tpu_custom_call.1} parent=1 // pred_check_branch
      %26 = sbr.rel (0) target = $region9
    $region8: #{tpu_custom_call.1} parent=1 // pred_region
      %s27 = sadd.s32 0, 0
      %p28 = scmp.lt.s32.totalorder %s27, 0
      %s29 = scalar_select %p28, %s27, 0
      %s31 = ssub.s32 128, 128
      %32 = vsyncadd [#allocation7], %s31
      %s33 = smul.addr %s29, 128
      %s34 = scalar_lea.hbm %s1, %s33
      %s36 = sshll.u32 [#allocation6], 4
      %s37 = int_to_ptr.vmem [resolvable:$true] %s36
      %39 = dma.hbm_to_vmem [thread:$0]  %s34, 128, %s37, [#allocation7]
    $region9: #{tpu_custom_call.1} parent=1 // pred_fallthru
      _
    // Predicated region
    $region10: #{tpu_custom_call.1} parent=1 // pred_check
      _
    $region11: #{tpu_custom_call.1} parent=1 // pred_check_branch
      %41 = sbr.rel (0) target = $region13
    $region12: #{tpu_custom_call.1} parent=1 // pred_region
      %42 = dma.done [#allocation4], 128
    $region13: #{tpu_custom_call.1} parent=1 // pred_fallthru
      _
    // Predicated region
    $region14: #{tpu_custom_call.1} parent=1 // pred_check
      _
    $region15: #{tpu_custom_call.1} parent=1 // pred_check_branch
      %44 = sbr.rel (0) target = $region17
    $region16: #{tpu_custom_call.1} parent=1 // pred_region
      %45 = dma.done [#allocation7], 128
    $region17: #{tpu_custom_call.1} parent=1 // pred_fallthru
      _
    %s46 = sadd.s32 0, 0
    %p47 = scmp.lt.s32.totalorder %s46, 0
    %s48 = scalar_select %p47, %s46, 0
    %s49 = sadd.s32 0, 0
    %p50 = scmp.lt.s32.totalorder %s49, 0
    %s51 = scalar_select %p50, %s49, 0
    %p52 = scmp.eq.s32.totalorder 0, 0
    // Predicated region
    $region18: #{tpu_custom_call.1} parent=1 // pred_check
      %p53 = pneg %p52
    $region19: #{tpu_custom_call.1} parent=1 // pred_check_branch
      %55 = sbr.rel (%p53) target = $region21
    $region20: #{tpu_custom_call.1} parent=1 // pred_region
      %56 = vst [vmem:[#allocation2] sm:$0xff] 0.0
    $region21: #{tpu_custom_call.1} parent=1 // pred_fallthru
      _
    %v57 = vld [vmem:[#allocation3] sm:$0xff]
    %v58 = vld [vmem:[#allocation6] sm:$0xff]
    %v59 = vmax.f32 %v57, 0.0
    %v60 = vand.u32 2147483647, %v57
    %v61 = vsub.f32 0.0, %v60
    %v62 = vmul.f32 %v61, 1.442695
    %v63 = vpow.pop %v62
    %v64 = vadd.f32 %v63, 1.0
    %v65 = vlog2.pop %v64
    %v66 = vmul.f32 %v65, 0.6931472
    %v67 = vadd.f32 %v59, %v66
    %v68 = vsub.f32 %v57, %v67
    %v69 = vmax.f32 %v68, -16.118095
    %v70 = vsub.f32 0.0, %v67
    %v71 = vmax.f32 %v70, -16.118095
    %v72 = vmul.f32 %v68, 1.442695
    %v73 = vpow.pop %v72
    %v74 = vsub.f32 1.0, %v73
    %v75 = vmul.f32 %v73, %v73
    %v76 = vmul.f32 %v74, %v74
    %v77 = vmul.f32 %v76, %v58
    %v78 = vmul.f32 %v77, %v69
    %v79 = vmul.f32 %v78, -0.25
    %v80 = vsub.f32 1.0, %v58
    %v81 = vmul.f32 %v75, %v80
    %v82 = vmul.f32 %v81, %v71
    %v83 = vmul.f32 %v82, -0.75
    %v84 = vadd.f32 %v79, %v83
    %v85 = vld [vmem:[#allocation2] sm:$0xff]
    %v86 = vadd.f32 %v84, 0.0
    %v87 = vadd.f32 %v85, %v86
    %88 = vst [vmem:[#allocation2] sm:$0xff] %v87
    // Predicated region
    $region22: #{tpu_custom_call.1} parent=1 // pred_check
      %p89 = pneg %p52
    $region23: #{tpu_custom_call.1} parent=1 // pred_check_branch
      %91 = sbr.rel (%p89) target = $region25
    $region24: #{tpu_custom_call.1} parent=1 // pred_region
      %v92 = vld [vmem:[#allocation2] sm:$0xff]
      %93 = vadd.xlane.f32.xlu0 %v92
      %v94 = vpop.xlane.xlu0 %93
      %v95 = vrot.slane %v94, 4
      %v96 = vadd.f32 %v94, %v95
      %v97 = vrot.slane %v96, 2
      %v98 = vadd.f32 %v96, %v97
      %v99 = vrot.slane %v98, 1
      %v100 = vadd.f32 %v98, %v99
      %s101 = vtos %v100
      %s102 = scalar_lea.smem [#allocation8], 0
      %103 = sst [smem:[%s102]] %s101
    $region25: #{tpu_custom_call.1} parent=1 // pred_fallthru
      _
    // Predicated region
    $region26: #{tpu_custom_call.1} parent=1 // pred_check
      _
    $region27: #{tpu_custom_call.1} parent=1 // pred_check_branch
      %105 = sbr.rel (0) target = $region29
    $region28: #{tpu_custom_call.1} parent=1 // pred_region
      %s107 = ssub.s32 16, 16
      %108 = vsyncadd [#allocation5], %s107
      %111 = dma.smem_to_hbm [#allocation8], 16, %s2, [#allocation5]
    $region29: #{tpu_custom_call.1} parent=1 // pred_fallthru
      _
    // Predicated region
    $region30: #{tpu_custom_call.1} parent=1 // pred_check
      _
    $region31: #{tpu_custom_call.1} parent=1 // pred_check_branch
      %113 = sbr.rel (0) target = $region33
    $region32: #{tpu_custom_call.1} parent=1 // pred_region
      %114 = dma.done [#allocation5], 16
    $region33: #{tpu_custom_call.1} parent=1 // pred_fallthru
      _
    %115 = sfence
    %116 = vsyncpa [#allocation4], 1
    %117 = vsyncpa [#allocation7], 1
    %118 = vsyncpa [#allocation5], 1

</llo_original>
